<compile_context>
chip_gen: v6e
topology: v6e:2x2x1
jax: 0.10.0
libtpu: 0.0.40
codegen_flags: <defaults>
</compile_context>

<pallas_src>
import functools

import jax
import jax.numpy as jnp
from jax.experimental import pallas as pl
from jax.experimental.pallas import tpu as pltpu

_TILE_M = 512                      # rows per matmul block (multiple of 8/16)
_VMEM_LIMIT = 48 * 1024 * 1024     # under v7x's 64 MiB/TC, plenty for v5e/v6e


def _round_up(x, m):
    return ((x + m - 1) // m) * m


def _cparams(grid_dims=0):
    if grid_dims:
        return pltpu.CompilerParams(
            dimension_semantics=("parallel",) * grid_dims,
            vmem_limit_bytes=_VMEM_LIMIT)
    return pltpu.CompilerParams(vmem_limit_bytes=_VMEM_LIMIT)


# ----------------------------------------------------------------------------
# Pallas kernels
# ----------------------------------------------------------------------------
def _apply_act(y, act):
    if act == "relu":
        return jnp.maximum(y, 0.0)
    if act == "sigmoid":
        return jax.nn.sigmoid(y)
    return y


def _mm_kernel(a_ref, w_ref, b_ref, o_ref, *, act):
    """o = act(a @ w + b)   a:(tm,K) bf16, w:(K,N) bf16, b:(1,N) f32."""
    y = jnp.dot(a_ref[...], w_ref[...], preferred_element_type=jnp.float32)
    o_ref[...] = _apply_act(y + b_ref[...], act).astype(o_ref.dtype)


def _mm_res_kernel(a_ref, w_ref, b_ref, r_ref, o_ref, *, act):
    """o = act(a @ w + b + r)   fused skip-connection conv."""
    y = jnp.dot(a_ref[...], w_ref[...], preferred_element_type=jnp.float32)
    y = y + b_ref[...] + r_ref[...].astype(jnp.float32)
    o_ref[...] = _apply_act(y, act).astype(o_ref.dtype)


def _mm_res_final_kernel(a_ref, w_ref, b_ref, r_ref, wf_ref, bf_ref, o_ref):
    """o = sigmoid(relu(a@w + b + r) @ wf + bf)  - last mask-decoder stage fused."""
    h = jnp.dot(a_ref[...], w_ref[...], preferred_element_type=jnp.float32)
    h = jnp.maximum(h + b_ref[...] + r_ref[...].astype(jnp.float32), 0.0)
    m = jnp.dot(h.astype(jnp.bfloat16), wf_ref[...],
                preferred_element_type=jnp.float32)
    o_ref[...] = jax.nn.sigmoid(m + bf_ref[...]).astype(o_ref.dtype)


def _masked_pool_kernel(f_ref, m_ref, o_ref):
    """Masked average pool over the spatial axis.  f:(B,HW,C) m:(B,HW,1) -> (B,1,C)."""
    f = f_ref[...].astype(jnp.float32)
    m = m_ref[...]
    num = jnp.sum(f * m, axis=1, keepdims=True)
    den = jnp.sum(m, axis=1, keepdims=True) + 1e-6
    o_ref[...] = (num * pl.reciprocal(den, approx=True)).astype(o_ref.dtype)


def _fuse_kernel(x_ref, k_ref, w_ref, b_ref, o_ref):
    """Neck fusion: channel modulation by ref-kernel + 1x1 conv + relu.

    x:(1,t,C) bf16, k:(1,1,C) f32 (per-batch block), w:(C,D) bf16, b:(1,D) f32.
    """
    x = x_ref[0]                                       # (t, C)
    k = k_ref[0].astype(jnp.bfloat16)                  # (1, C)
    y = jnp.dot(x * k, w_ref[...], preferred_element_type=jnp.float32) + b_ref[...]
    o_ref[0] = jnp.maximum(y, 0.0).astype(o_ref.dtype)


def _bbox_head_kernel(x_ref, w1_ref, b1_ref, w2_ref, b2_ref, o_ref):
    """Fused 2-layer MLP + spatial mean.  x:(1,HW,C) -> o:(1,1,4)."""
    x = x_ref[0]                                                           # (HW, C)
    h = jnp.maximum(
        jnp.dot(x, w1_ref[...], preferred_element_type=jnp.float32) + b1_ref[...], 0.0)
    y = jnp.dot(h.astype(jnp.bfloat16), w2_ref[...],
                preferred_element_type=jnp.float32) + b2_ref[...]          # (HW, 4)
    o_ref[0] = jnp.mean(y, axis=0, keepdims=True).astype(o_ref.dtype)


def _corner_head_kernel(x_ref, w1_ref, b1_ref, w2_ref, b2_ref, ca_ref, cb_ref, o_ref):
    """Fused 2-layer MLP + spatial softmax + coordinate expectation.

    x:(1,HW,C); ca/cb:(HW,4) coordinate templates for tl/br channels -> o:(1,1,4).
    """
    x = x_ref[0]                                                           # (HW, C)
    h = jnp.maximum(
        jnp.dot(x, w1_ref[...], preferred_element_type=jnp.float32) + b1_ref[...], 0.0)
    s = jnp.dot(h.astype(jnp.bfloat16), w2_ref[...],
                preferred_element_type=jnp.float32) + b2_ref[...]          # (HW, 2)
    s = s - jnp.max(s, axis=0, keepdims=True)
    e = jnp.exp(s)
    p = e * pl.reciprocal(jnp.sum(e, axis=0, keepdims=True), approx=True)  # (HW, 2)
    expect = p[:, 0:1] * ca_ref[...] + p[:, 1:2] * cb_ref[...]             # (HW, 4)
    o_ref[0] = jnp.sum(expect, axis=0, keepdims=True).astype(o_ref.dtype)


# ----------------------------------------------------------------------------
# Tiled wrappers around pallas_call
# ----------------------------------------------------------------------------
def linear(a, w, b, act=None, res=None, out_dtype=jnp.bfloat16):
    """act(a @ w + b [+ res]) via an M-tiled, parallel-grid Pallas MXU kernel."""
    M, K = a.shape
    N = w.shape[1]
    tile = min(_TILE_M, _round_up(M, 8))
    Mp = _round_up(M, tile)
    pad = Mp - M
    a_p = jnp.pad(a.astype(jnp.bfloat16), ((0, pad), (0, 0)))
    w_b = w.astype(jnp.bfloat16)
    b2 = b.reshape(1, N).astype(jnp.float32)
    in_specs = [pl.BlockSpec((tile, K), lambda i: (i, 0)),
                pl.BlockSpec((K, N), lambda i: (0, 0)),
                pl.BlockSpec((1, N), lambda i: (0, 0))]
    args = [a_p, w_b, b2]
    if res is None:
        kern = functools.partial(_mm_kernel, act=act)
    else:
        r_p = jnp.pad(res.astype(jnp.bfloat16), ((0, pad), (0, 0)))
        in_specs.append(pl.BlockSpec((tile, N), lambda i: (i, 0)))
        args.append(r_p)
        kern = functools.partial(_mm_res_kernel, act=act)
    out = pl.pallas_call(
        kern,
        grid=(Mp // tile,),
        in_specs=in_specs,
        out_specs=pl.BlockSpec((tile, N), lambda i: (i, 0)),
        out_shape=jax.ShapeDtypeStruct((Mp, N), out_dtype),
        compiler_params=_cparams(1),
    )(*args)
    return out[:M] if pad else out


def linear_skip_final(a, w, b, res, wf, bf):
    """sigmoid(relu(a@w + b + res) @ wf + bf), M-tiled.  Returns (M, 1) f32."""
    M, K = a.shape
    N = w.shape[1]
    Nf = wf.shape[1]
    tile = min(_TILE_M, _round_up(M, 8))
    Mp = _round_up(M, tile)
    pad = Mp - M
    a_p = jnp.pad(a.astype(jnp.bfloat16), ((0, pad), (0, 0)))
    r_p = jnp.pad(res.astype(jnp.bfloat16), ((0, pad), (0, 0)))
    out = pl.pallas_call(
        _mm_res_final_kernel,
        grid=(Mp // tile,),
        in_specs=[pl.BlockSpec((tile, K), lambda i: (i, 0)),
                  pl.BlockSpec((K, N), lambda i: (0, 0)),
                  pl.BlockSpec((1, N), lambda i: (0, 0)),
                  pl.BlockSpec((tile, N), lambda i: (i, 0)),
                  pl.BlockSpec((N, Nf), lambda i: (0, 0)),
                  pl.BlockSpec((1, Nf), lambda i: (0, 0))],
        out_specs=pl.BlockSpec((tile, Nf), lambda i: (i, 0)),
        out_shape=jax.ShapeDtypeStruct((Mp, Nf), jnp.float32),
        compiler_params=_cparams(1),
    )(a_p, w.astype(jnp.bfloat16), b.reshape(1, N).astype(jnp.float32),
      r_p, wf.astype(jnp.bfloat16), bf.reshape(1, Nf).astype(jnp.float32))
    return out[:M] if pad else out


def masked_avg_pool(f, m):
    """f:(B,HW,C) m:(B,HW,1) -> (B,1,C) f32."""
    Bn, _, C = f.shape
    return pl.pallas_call(
        _masked_pool_kernel,
        out_shape=jax.ShapeDtypeStruct((Bn, 1, C), jnp.float32),
        compiler_params=_cparams(),
    )(f, m)


def conv3x3_s2(x_nhwc, w, b, act="relu"):
    """3x3 / stride-2 / pad-1 conv: bf16 im2col (JAX glue) + tiled Pallas matmul."""
    # TODO(synk): move the 9-tap shift-and-accumulate fully inside the kernel to
    # avoid materializing the im2col slab in HBM (needs strided in-kernel slices).
    Bn, H, W, Cin = x_nhwc.shape
    OH, OW = H // 2, W // 2
    xp = jnp.pad(x_nhwc.astype(jnp.bfloat16), ((0, 0), (1, 1), (1, 1), (0, 0)))
    patches = [xp[:, ki:ki + 2 * OH:2, kj:kj + 2 * OW:2, :]
               for ki in range(3) for kj in range(3)]
    a = jnp.concatenate(patches, axis=-1).reshape(Bn * OH * OW, 9 * Cin)
    wf = w.reshape(9 * Cin, -1)
    y = linear(a, wf, b, act=act)
    return y.reshape(Bn, OH, OW, -1)


# ----------------------------------------------------------------------------
# Synthetic sub-modules (deterministic params)
# ----------------------------------------------------------------------------
def _w(key, shape, scale=0.1):
    return jax.random.normal(key, shape, jnp.float32) * scale


class Backbone:
    """Tiny conv backbone: conv1/layer1/layer2/layer3 at strides 2/4/8/16 (NHWC, bf16)."""

    def __init__(self, key):
        specs = [("conv1", 3, 8), ("layer1", 8, 16), ("layer2", 16, 32), ("layer3", 32, 64)]
        keys = jax.random.split(key, len(specs))
        self.params = {}
        for k, (name, cin, cout) in zip(keys, specs):
            self.params[name + "_w"] = _w(k, (3, 3, cin, cout)).astype(jnp.bfloat16)
            self.params[name + "_b"] = jnp.zeros((cout,), jnp.float32)

    def __call__(self, im_nchw, layers):
        x = jnp.transpose(im_nchw, (0, 2, 3, 1)).astype(jnp.bfloat16)  # NCHW -> NHWC
        feats = {}
        for name in ("conv1", "layer1", "layer2", "layer3"):
            x = conv3x3_s2(x, self.params[name + "_w"], self.params[name + "_b"], act="relu")
            feats[name] = x
        return {name: feats[name] for name in layers}  # ordered like `layers`


class Neck:
    """Reference-kernel pooling (train branch) + modulation fusion (test branch)."""

    def __init__(self, key, c=64, stride=16):
        self.stride = stride
        self.cout = c
        self.adjust_w = _w(key, (c, c)).astype(jnp.bfloat16)
        self.adjust_b = jnp.zeros((c,), jnp.float32)
        self.ref_kernel = None

    def get_ref_kernel(self, train_feat_list, train_bb):
        feat = train_feat_list[0]                     # (N*B, h, w, C) NHWC bf16
        bb = train_bb.reshape(-1, 4).astype(jnp.float32)
        Bn, Hc, Wc, C = feat.shape
        ys = (jnp.arange(Hc, dtype=jnp.float32) + 0.5) * self.stride
        xs = (jnp.arange(Wc, dtype=jnp.float32) + 0.5) * self.stride
        yy, xx = jnp.meshgrid(ys, xs, indexing="ij")
        x0 = bb[:, 0][:, None, None]
        y0 = bb[:, 1][:, None, None]
        x1 = x0 + bb[:, 2][:, None, None]
        y1 = y0 + bb[:, 3][:, None, None]
        inside = (xx[None] >= x0) & (xx[None] < x1) & (yy[None] >= y0) & (yy[None] < y1)
        mask = inside.astype(jnp.float32).reshape(Bn, Hc * Wc, 1)
        f = feat.reshape(Bn, Hc * Wc, C)
        self.ref_kernel = masked_avg_pool(f, mask)    # (B, 1, C) f32
        return self.ref_kernel

    def fuse_feat(self, feat_list):
        feat = feat_list[0]
        Bn, Hc, Wc, C = feat.shape
        D = self.cout
        HW = Hc * Wc
        x = feat.reshape(Bn, HW, C).astype(jnp.bfloat16)
        tile = min(_TILE_M, _round_up(HW, 8))
        HWp = _round_up(HW, tile)
        if HWp != HW:
            x = jnp.pad(x, ((0, 0), (0, HWp - HW), (0, 0)))
        out = pl.pallas_call(
            _fuse_kernel,
            grid=(Bn, HWp // tile),
            in_specs=[pl.BlockSpec((1, tile, C), lambda b, i: (b, i, 0)),
                      pl.BlockSpec((1, 1, C), lambda b, i: (b, 0, 0)),
                      pl.BlockSpec((C, D), lambda b, i: (0, 0)),
                      pl.BlockSpec((1, D), lambda b, i: (0, 0))],
            out_specs=pl.BlockSpec((1, tile, D), lambda b, i: (b, i, 0)),
            out_shape=jax.ShapeDtypeStruct((Bn, HWp, D), jnp.bfloat16),
            compiler_params=_cparams(2),
        )(x, self.ref_kernel, self.adjust_w, self.adjust_b.reshape(1, D))
        return out[:, :HW].reshape(Bn, Hc, Wc, D)


class BBoxHead:
    def __init__(self, key, cin=64, ch=32):
        k1, k2 = jax.random.split(key)
        self.w1 = _w(k1, (cin, ch)).astype(jnp.bfloat16)
        self.b1 = jnp.zeros((ch,), jnp.float32)
        self.w2 = _w(k2, (ch, 4)).astype(jnp.bfloat16)
        self.b2 = jnp.zeros((4,), jnp.float32)

    def __call__(self, fusion_feat):
        Bn, Hc, Wc, C = fusion_feat.shape
        HW = Hc * Wc
        ch = self.w1.shape[1]
        x = fusion_feat.reshape(Bn, HW, C).astype(jnp.bfloat16)
        out = pl.pallas_call(
            _bbox_head_kernel,
            grid=(Bn,),
            in_specs=[pl.BlockSpec((1, HW, C), lambda b: (b, 0, 0)),
                      pl.BlockSpec((C, ch), lambda b: (0, 0)),
                      pl.BlockSpec((1, ch), lambda b: (0, 0)),
                      pl.BlockSpec((ch, 4), lambda b: (0, 0)),
                      pl.BlockSpec((1, 4), lambda b: (0, 0))],
            out_specs=pl.BlockSpec((1, 1, 4), lambda b: (b, 0, 0)),
            out_shape=jax.ShapeDtypeStruct((Bn, 1, 4), jnp.float32),
            compiler_params=_cparams(1),
        )(x, self.w1, self.b1.reshape(1, ch), self.w2, self.b2.reshape(1, 4))
        return out.reshape(Bn, 4)


class CornerHead:
    def __init__(self, key, cin=64, ch=32, stride=16):
        k1, k2 = jax.random.split(key)
        self.w1 = _w(k1, (cin, ch)).astype(jnp.bfloat16)
        self.b1 = jnp.zeros((ch,), jnp.float32)
        self.w2 = _w(k2, (ch, 2)).astype(jnp.bfloat16)
        self.b2 = jnp.zeros((2,), jnp.float32)
        self.stride = stride

    def _coords(self, Hc, Wc):
        xs = (jnp.arange(Wc, dtype=jnp.float32) + 0.5) * self.stride
        ys = (jnp.arange(Hc, dtype=jnp.float32) + 0.5) * self.stride
        cx = jnp.tile(xs, Hc)                         # (HW,)
        cy = jnp.repeat(ys, Wc)                       # (HW,)
        zero = jnp.zeros_like(cx)
        ca = jnp.stack([cx, cy, zero, zero], axis=1)  # contribution of tl channel
        cb = jnp.stack([zero, zero, cx, cy], axis=1)  # contribution of br channel
        return ca, cb

    def get_heatmap(self, fusion_feat):
        Bn, Hc, Wc, C = fusion_feat.shape
        h = linear(fusion_feat.reshape(-1, C), self.w1, self.b1, act="relu")
        s = linear(h, self.w2, self.b2, out_dtype=jnp.float32).reshape(Bn, Hc, Wc, 2)
        return jnp.transpose(s, (0, 3, 1, 2))         # (B, 2, H, W)

    def __call__(self, fusion_feat):
        Bn, Hc, Wc, C = fusion_feat.shape
        HW = Hc * Wc
        ch = self.w1.shape[1]
        x = fusion_feat.reshape(Bn, HW, C).astype(jnp.bfloat16)
        ca, cb = self._coords(Hc, Wc)
        out = pl.pallas_call(
            _corner_head_kernel,
            grid=(Bn,),
            in_specs=[pl.BlockSpec((1, HW, C), lambda b: (b, 0, 0)),
                      pl.BlockSpec((C, ch), lambda b: (0, 0)),
                      pl.BlockSpec((1, ch), lambda b: (0, 0)),
                      pl.BlockSpec((ch, 2), lambda b: (0, 0)),
                      pl.BlockSpec((1, 2), lambda b: (0, 0)),
                      pl.BlockSpec((HW, 4), lambda b: (0, 0)),
                      pl.BlockSpec((HW, 4), lambda b: (0, 0))],
            out_specs=pl.BlockSpec((1, 1, 4), lambda b: (b, 0, 0)),
            out_shape=jax.ShapeDtypeStruct((Bn, 1, 4), jnp.float32),
            compiler_params=_cparams(1),
        )(x, self.w1, self.b1.reshape(1, ch), self.w2, self.b2.reshape(1, 2), ca, cb)
        return out.reshape(Bn, 4)                     # (tl_x, tl_y, br_x, br_y)


class MaskHead:
    def __init__(self, key, cin=64, ch=32, skip_channels=(8, 16, 32)):
        ks = jax.random.split(key, 5)
        self.wp = _w(ks[0], (cin, ch)).astype(jnp.bfloat16)
        self.bp = jnp.zeros((ch,), jnp.float32)
        self.ws2 = _w(ks[1], (skip_channels[2], ch)).astype(jnp.bfloat16)
        self.bs2 = jnp.zeros((ch,), jnp.float32)
        self.ws1 = _w(ks[2], (skip_channels[1], ch)).astype(jnp.bfloat16)
        self.bs1 = jnp.zeros((ch,), jnp.float32)
        self.ws0 = _w(ks[3], (skip_channels[0], ch)).astype(jnp.bfloat16)
        self.bs0 = jnp.zeros((ch,), jnp.float32)
        self.wf = _w(ks[4], (ch, 1)).astype(jnp.bfloat16)
        self.bf = jnp.zeros((1,), jnp.float32)

    def __call__(self, fusion_feat, Lfeat_list):
        c1, l1, l2 = Lfeat_list                       # strides 2, 4, 8 (NHWC, bf16)
        Bn, Hc, Wc, C = fusion_feat.shape
        ch = self.wp.shape[1]
        p = linear(fusion_feat.reshape(-1, C), self.wp, self.bp, act="relu")
        p = p.reshape(Bn, Hc, Wc, ch)

        def up2(x):
            # TODO(synk): fold the nearest 2x upsample into the skip-conv kernel
            # (repeated-row reads) to cut the residual HBM round trip 4x; kept as
            # bf16 JAX glue here for lowering robustness.
            return jnp.repeat(jnp.repeat(x, 2, axis=1), 2, axis=2)

        for skip, w, b in ((l2, self.ws2, self.bs2), (l1, self.ws1, self.bs1)):
            r = up2(p)
            Bs, Hs, Ws, Cs = skip.shape
            p = linear(skip.reshape(-1, Cs), w, b, act="relu",
                       res=r.reshape(Bs * Hs * Ws, ch)).reshape(Bs, Hs, Ws, ch)

        # Last skip stage fused with the final 1x1 sigmoid conv: the full-res
        # (B, H/2, W/2, ch) intermediate never round-trips through HBM.
        r = up2(p)
        Bs, Hs, Ws, Cs = c1.shape
        m = linear_skip_final(c1.reshape(-1, Cs), self.ws0, self.bs0,
                              r.reshape(Bs * Hs * Ws, ch), self.wf, self.bf)
        m = m.reshape(Bn, Hs, Ws, 1)
        return jnp.transpose(m, (0, 3, 1, 2))         # NCHW (B, 1, H/2, W/2)


# ----------------------------------------------------------------------------
# SEbcmnet
# ----------------------------------------------------------------------------
class SEbcmnet:
    """Scale Estimation network with three branches: bbox, corner and mask."""

    def __init__(self, feature_extractor, neck_module, head_module, used_layers,
                 extractor_grad=True, unfreeze_layer3=False):
        self.feature_extractor = feature_extractor
        self.neck = neck_module
        self.bbox_head, self.corner_head, self.mask_head = head_module
        self.used_layers = used_layers
        # extractor_grad / unfreeze_layer3 only control PyTorch autograd; no-op here.

    def forward(self, train_imgs, test_imgs, train_bb, mode="train"):
        self.forward_ref(train_imgs, train_bb)
        return self.forward_test(test_imgs, mode)

    def forward_ref(self, train_imgs, train_bb):
        num_sequences = train_imgs.shape[-4]
        num_train_images = train_imgs.shape[0] if train_imgs.ndim == 5 else 1
        train_feat_dict = self.extract_backbone_features(
            train_imgs.reshape((-1,) + train_imgs.shape[-3:]))
        train_feat_list = [feat for feat in train_feat_dict.values()]
        self.neck.get_ref_kernel(
            train_feat_list, train_bb.reshape(num_train_images, num_sequences, 4))

    def forward_test(self, test_imgs, mode="train"):
        output = {}
        test_feat_dict = self.extract_backbone_features(
            test_imgs.reshape((-1,) + test_imgs.shape[-3:]),
            layers=["conv1", "layer1", "layer2", "layer3"])
        Lfeat_list = [feat for name, feat in test_feat_dict.items() if name != "layer3"]
        fusion_feat = self.neck.fuse_feat([test_feat_dict["layer3"]])
        if mode == "train":
            output["bbox"] = self.bbox_head(fusion_feat)
            output["corner"] = self.corner_head(fusion_feat)
            output["mask"] = self.mask_head(fusion_feat, Lfeat_list)
        elif mode == "test":
            output["feat"] = fusion_feat
            output["bbox"] = self.bbox_head(fusion_feat)
            output["corner"] = self.corner_head(fusion_feat)
            output["mask"] = self.mask_head(fusion_feat, Lfeat_list)
        else:
            raise ValueError("mode should be train or test")
        return output

    def extract_backbone_features(self, im, layers=None):
        if layers is None:
            layers = self.used_layers
        return self.feature_extractor(im, layers)

    def extract_features(self, im, layers):
        return self.feature_extractor(im, layers)


# ----------------------------------------------------------------------------
# Demo
# ----------------------------------------------------------------------------
if __name__ == "__main__":
    key = jax.random.PRNGKey(0)
    k_bb, k_neck, k_bbox, k_corner, k_mask, k_data = jax.random.split(key, 6)

    backbone = Backbone(k_bb)
    neck = Neck(k_neck, c=64, stride=16)
    heads = (BBoxHead(k_bbox), CornerHead(k_corner, stride=16), MaskHead(k_mask))
    net = SEbcmnet(backbone, neck, heads, used_layers=["layer3"])

    B, H, W = 2, 64, 64
    train_imgs = jax.random.normal(jax.random.fold_in(k_data, 0), (1, B, 3, H, W), jnp.float32)
    test_imgs = jax.random.normal(jax.random.fold_in(k_data, 1), (1, B, 3, H, W), jnp.float32)
    train_bb = jnp.array([[[16.0, 16.0, 32.0, 32.0],
                           [8.0, 12.0, 40.0, 36.0]]], jnp.float32)   # (1, B, 4) xywh

    out = net.forward(train_imgs, test_imgs, train_bb, mode="train")
    out = jax.tree_util.tree_map(jax.block_until_ready, out)

    assert out["bbox"].shape == (B, 4)
    assert out["corner"].shape == (B, 4)
    assert out["mask"].shape == (B, 1, 32, 32)
    assert all(jnp.all(jnp.isfinite(v.astype(jnp.float32)))
               for v in jax.tree_util.tree_leaves(out))
    print("KERNEL_OK")
</pallas_src>

<mosaic_0001>
module attributes {stable_mosaic.version = 11 : i64} {
  func.func @_mm_kernel(%arg0: i32, %arg1: memref<512x27xbf16, #tpu.memory_space<vmem>>, %arg2: memref<27x8xbf16, #tpu.memory_space<vmem>>, %arg3: memref<1x8xf32, #tpu.memory_space<vmem>>, %arg4: memref<512x8xbf16, #tpu.memory_space<vmem>>) attributes {dimension_semantics = [#tpu.dimension_semantics<parallel>], iteration_bounds = array<i64: 4>, scalar_prefetch = 0 : i64, scratch_operands = 0 : i64, tpu.core_type = #tpu.core_type<tc>, window_params = [{transform_indices = @transform_0, window_bounds = array<i64: 512, 27>}, {pipeline_mode = #tpu.pipeline_mode<synchronous>, transform_indices = @transform_1, window_bounds = array<i64: 27, 8>}, {pipeline_mode = #tpu.pipeline_mode<synchronous>, transform_indices = @transform_2, window_bounds = array<i64: 1, 8>}, {transform_indices = @transform_3, window_bounds = array<i64: 512, 8>}]} {
    %c0 = arith.constant 0 : index
    %c0_0 = arith.constant 0 : index
    %0 = vector.load %arg1[%c0, %c0_0] : memref<512x27xbf16, #tpu.memory_space<vmem>>, vector<512x27xbf16>
    %c0_1 = arith.constant 0 : index
    %c0_2 = arith.constant 0 : index
    %1 = vector.load %arg2[%c0_1, %c0_2] : memref<27x8xbf16, #tpu.memory_space<vmem>>, vector<27x8xbf16>
    %cst = arith.constant dense<0.000000e+00> : vector<512x8xf32>
    %2 = tpu.matmul %0, %1, %cst {dimension_numbers = #tpu.dot_dimension_numbers<[1], [0], [0], [1], [0, 0, 1, 1], [], []>} : vector<512x27xbf16>, vector<27x8xbf16>, vector<512x8xf32> -> vector<512x8xf32>
    %c0_3 = arith.constant 0 : index
    %c0_4 = arith.constant 0 : index
    %3 = vector.load %arg3[%c0_3, %c0_4] : memref<1x8xf32, #tpu.memory_space<vmem>>, vector<1x8xf32>
    %4 = vector.broadcast %3 : vector<1x8xf32> to vector<512x8xf32>
    %5 = arith.addf %2, %4 : vector<512x8xf32>
    %cst_5 = arith.constant 0.000000e+00 : f32
    %6 = vector.broadcast %cst_5 : f32 to vector<512x8xf32>
    %7 = arith.maximumf %5, %6 : vector<512x8xf32>
    %8 = arith.truncf %7 : vector<512x8xf32> to vector<512x8xbf16>
    %c0_6 = arith.constant 0 : index
    %c0_7 = arith.constant 0 : index
    %9 = vector.load %arg4[%c0_6, %c0_7] : memref<512x8xbf16, #tpu.memory_space<vmem>>, vector<512x8xbf16>
    tpu.vector_store %arg4[%c0_6, %c0_7], %8 {strides = array<i32>} : memref<512x8xbf16, #tpu.memory_space<vmem>>, vector<512x8xbf16>,
    return
  }
  func.func @transform_0(%arg0: i32) -> (i32, i32) {
    %c0_i32 = arith.constant 0 : i32
    %c0_i32_0 = arith.constant 0 : i32
    return %arg0, %c0_i32 : i32, i32
  }
  func.func @transform_1(%arg0: i32) -> (i32, i32) {
    %c0_i32 = arith.constant 0 : i32
    %c0_i32_0 = arith.constant 0 : i32
    %c0_i32_1 = arith.constant 0 : i32
    return %c0_i32, %c0_i32_0 : i32, i32
  }
  func.func @transform_2(%arg0: i32) -> (i32, i32) {
    %c0_i32 = arith.constant 0 : i32
    %c0_i32_0 = arith.constant 0 : i32
    %c0_i32_1 = arith.constant 0 : i32
    return %c0_i32, %c0_i32_0 : i32, i32
  }
  func.func @transform_3(%arg0: i32) -> (i32, i32) {
    %c0_i32 = arith.constant 0 : i32
    %c0_i32_0 = arith.constant 0 : i32
    return %arg0, %c0_i32 : i32, i32
  }
}

</mosaic_0001>

<llo_original>
// kernel: tpu_custom_call.1
$region0: #{tpu_custom_call.1}
  #allocation0 [shape = 'u32[]', space=smem, size = 0x4, offset = 0x4, fixed_abs, tag = 'smem constant byte address 0x4 - core index']
  #allocation1 [shape = 'u32[144,128]{1,0:T(1,128)}', space=vmem, size = 0x12000, scoped, tag = 'internal scratch']
  %s0 = inlined_call_operand.vmem [shape: bf16[2048,27], index: 0, kind: input, shape index: {}]
  %s1 = inlined_call_operand.vmem [shape: bf16[27,8], index: 1, kind: input, shape index: {}]
  %s2 = inlined_call_operand.vmem [shape: f32[1,8], index: 2, kind: input, shape index: {}]
  %s3 = inlined_call_operand.vmem [shape: bf16[2048,8], index: 3, kind: output, shape index: {}]
  %s4 = sld [smem:[#allocation0]]
  $region45: #{tpu_custom_call.1} parent=0
    _
  %s6 = ssub.s32 1, %s4
  %s7 = scalar_select 0, %s6, %s4
  loop: start=0, step=1, limit=6
  $region2: #{tpu_custom_call.1} parent=0 // loop_pre_header
    _
  $region3: #{tpu_custom_call.1} parent=0 // loop_header
    %s9 = sphi 0, %s13
    %p10 = scmp.ge.s32.totalorder %s9, 6
    %s19 = sphi 0, %s21
    %s22 = sphi 0, %s19
    %s23 = sphi 0, %s22
    %s39 = sphi 0, %s23
    %s43 = sphi 0, %s43
    %s45 = sphi 0, %s43
    %s46 = sphi 0, %s45
    %s60 = sphi 0, %s46
    %s64 = sphi 0, %s64
    %s66 = sphi 0, %s64
    %s67 = sphi 0, %s66
    %s81 = sphi 0, %s67
    %s87 = sphi 0, %s89
    %s90 = sphi 0, %s87
    %s91 = sphi 0, %s90
    %s107 = sphi 0, %s91
  $region4: #{tpu_custom_call.1} parent=0 // loop_header_branch
    %12 = sbr.rel (%p10) target = $region8
  $region5: #{tpu_custom_call.1} parent=0 // loop_body
    %s14 = ssub.s32 %s9, 1
    %s15 = ssub.s32 %s9, 2
    %s16 = sadd.s32 %s9, 1
    %s17 = ssub.s32 %s9, %s16
    %p18 = scmp.eq.s32.totalorder %s17, 0
    %s20 = sadd.s32 %s19, 1
    %s21 = scalar_select %p18, %s19, %s20
    %p24 = pneg %p18
    %p25 = scmp.eq.s32.totalorder %s9, 3
    %p26 = por %p24, %p25
    %p27 = scmp.ne.s32.totalorder %s19, %s22
    %p28 = scmp.eq.s32.totalorder %s9, 0
    %p29 = por %p27, %p28
    %p30 = scmp.ne.s32.totalorder %s19, %s22
    %p31 = scmp.eq.s32.totalorder %s14, 3
    %p32 = por %p30, %p31
    %p33 = scmp.ne.s32.totalorder %s22, %s23
    %p34 = scmp.eq.s32.totalorder %s14, 0
    %p35 = por %p33, %p34
    %p36 = scmp.ne.s32.totalorder %s22, %s23
    %p37 = scmp.eq.s32.totalorder %s15, 3
    %p38 = por %p36, %p37
    %p40 = scmp.ne.s32.totalorder %s23, %s39
    %p41 = scmp.eq.s32.totalorder %s15, 0
    %p42 = por %p40, %p41
    %s44 = sadd.s32 %s43, 1
    %p47 = scmp.eq.s32.totalorder %s9, 3
    %p48 = scmp.ne.s32.totalorder %s43, %s45
    %p49 = scmp.eq.s32.totalorder %s9, 0
    %p50 = por %p48, %p49
    %p51 = scmp.ne.s32.totalorder %s43, %s45
    %p52 = scmp.eq.s32.totalorder %s14, 3
    %p53 = por %p51, %p52
    %p54 = scmp.ne.s32.totalorder %s45, %s46
    %p55 = scmp.eq.s32.totalorder %s14, 0
    %p56 = por %p54, %p55
    %p57 = scmp.ne.s32.totalorder %s45, %s46
    %p58 = scmp.eq.s32.totalorder %s15, 3
    %p59 = por %p57, %p58
    %p61 = scmp.ne.s32.totalorder %s46, %s60
    %p62 = scmp.eq.s32.totalorder %s15, 0
    %p63 = por %p61, %p62
    %s65 = sadd.s32 %s64, 1
    %p68 = scmp.eq.s32.totalorder %s9, 3
    %p69 = scmp.ne.s32.totalorder %s64, %s66
    %p70 = scmp.eq.s32.totalorder %s9, 0
    %p71 = por %p69, %p70
    %p72 = scmp.ne.s32.totalorder %s64, %s66
    %p73 = scmp.eq.s32.totalorder %s14, 3
    %p74 = por %p72, %p73
    %p75 = scmp.ne.s32.totalorder %s66, %s67
    %p76 = scmp.eq.s32.totalorder %s14, 0
    %p77 = por %p75, %p76
    %p78 = scmp.ne.s32.totalorder %s66, %s67
    %p79 = scmp.eq.s32.totalorder %s15, 3
    %p80 = por %p78, %p79
    %p82 = scmp.ne.s32.totalorder %s67, %s81
    %p83 = scmp.eq.s32.totalorder %s15, 0
    %p84 = por %p82, %p83
    %s85 = ssub.s32 %s9, %s16
    %p86 = scmp.eq.s32.totalorder %s85, 0
    %s88 = sadd.s32 %s87, 1
    %s89 = scalar_select %p86, %s87, %s88
    %p92 = pneg %p86
    %p93 = scmp.eq.s32.totalorder %s9, 3
    %p94 = por %p92, %p93
    %p95 = scmp.ne.s32.totalorder %s87, %s90
    %p96 = scmp.eq.s32.totalorder %s9, 0
    %p97 = por %p95, %p96
    %p98 = scmp.ne.s32.totalorder %s87, %s90
    %p99 = scmp.eq.s32.totalorder %s14, 3
    %p100 = por %p98, %p99
    %p101 = scmp.ne.s32.totalorder %s90, %s91
    %p102 = scmp.eq.s32.totalorder %s14, 0
    %p103 = por %p101, %p102
    %p104 = scmp.ne.s32.totalorder %s90, %s91
    %p105 = scmp.eq.s32.totalorder %s15, 3
    %p106 = por %p104, %p105
    %p108 = scmp.ne.s32.totalorder %s91, %s107
    %p109 = scmp.eq.s32.totalorder %s15, 0
    %p110 = por %p108, %p109
    %p111 = scmp.le.s32.totalorder 1, %s9
    %p112 = scmp.lt.s32.totalorder %s9, 5
    %p113 = pnand %p111, %p112
    %p114 = pneg %p113
    // Predicated region
    $region9: #{tpu_custom_call.1} parent=5 // pred_check
      _
    $region10: #{tpu_custom_call.1} parent=5 // pred_check_branch
      %116 = sbr.rel (%p113) target = $region12
    $region11: #{tpu_custom_call.1} parent=5 // pred_region
      %s117 = ssub.s32 %s9, 1
      // Predicated region
      $region13: #{tpu_custom_call.1} parent=11 // pred_check
        %p118 = pneg %p56
      $region14: #{tpu_custom_call.1} parent=11 // pred_check_branch
        %120 = sbr.rel (%p118) target = $region16
      $region15: #{tpu_custom_call.1} parent=11 // pred_region
        _
      $region16: #{tpu_custom_call.1} parent=11 // pred_fallthru
        _
      // Predicated region
      $region17: #{tpu_custom_call.1} parent=11 // pred_check
        %p121 = pneg %p77
      $region18: #{tpu_custom_call.1} parent=11 // pred_check_branch
        %123 = sbr.rel (%p121) target = $region20
      $region19: #{tpu_custom_call.1} parent=11 // pred_region
        _
      $region20: #{tpu_custom_call.1} parent=11 // pred_fallthru
        _
    $region12: #{tpu_custom_call.1} parent=5 // pred_fallthru
      _
    %p124 = scmp.lt.s32.totalorder %s9, 4
    // Predicated region
    $region21: #{tpu_custom_call.1} parent=5 // pred_check
      %p125 = pneg %p124
    $region22: #{tpu_custom_call.1} parent=5 // pred_check_branch
      %127 = sbr.rel (%p125) target = $region24
    $region23: #{tpu_custom_call.1} parent=5 // pred_region
      // Predicated region
      $region25: #{tpu_custom_call.1} parent=23 // pred_check
        %p128 = pneg %p29
      $region26: #{tpu_custom_call.1} parent=23 // pred_check_branch
        %130 = sbr.rel (%p128) target = $region28
      $region27: #{tpu_custom_call.1} parent=23 // pred_region
        %s131 = smul.u32 64, %s9
        %p132 = scmp.lt.s32.totalorder %s131, 255
        %s133 = scalar_select %p132, %s131, 255
        %s134 = smul.addr %s133, 4
        %s135 = scalar_lea.vmem %s0, %s134
        %s136 = smul.u32 64, %s9
      $region28: #{tpu_custom_call.1} parent=23 // pred_fallthru
        _
    $region24: #{tpu_custom_call.1} parent=5 // pred_fallthru
      _
    %p137 = scmp.le.s32.totalorder 1, %s9
    %p138 = scmp.lt.s32.totalorder %s9, 5
    %p139 = pnand %p137, %p138
    %p140 = pneg %p139
    // Predicated region
    $region29: #{tpu_custom_call.1} parent=5 // pred_check
      _
    $region30: #{tpu_custom_call.1} parent=5 // pred_check_branch
      %142 = sbr.rel (%p139) target = $region32
    $region31: #{tpu_custom_call.1} parent=5 // pred_region
      %s143 = ssub.s32 %s9, 1
      %s144 = smul.u32 64, %s14
      %p145 = scmp.lt.s32.totalorder %s144, 255
      %s146 = scalar_select %p145, %s144, 255
      %s147 = smul.addr %s146, 4
      %s148 = scalar_lea.vmem %s0, %s147
      %p149 = pneg %p35
      %p150 = pneg %p32
      %p151 = pneg %p56
      %p152 = pneg %p53
      %p153 = pneg %p77
      %p154 = pneg %p74
      %p155 = pneg %p103
      %p156 = pneg %p100
      %s157 = smul.u32 64, %s14
      %p158 = scmp.lt.s32.totalorder %s157, 255
      %s159 = scalar_select %p158, %s157, 255
      %s160 = smul.addr %s159, 4
      %s161 = scalar_lea.vmem %s3, %s160
      %s162 = smul.u32 64, %s14
      %p163 = scmp.lt.s32.totalorder %s162, 255
      %s164 = scalar_select %p163, %s162, 255
      %s165 = smul.addr %s164, 4
      %s166 = scalar_lea.vmem %s0, %s165
      %s167 = smul.u32 64, %s14
      %s168 = smul.u32 64, %s14
      %p169 = scmp.lt.s32.totalorder %s168, 255
      %s170 = scalar_select %p169, %s168, 255
      %s171 = smul.addr %s170, 4
      %s172 = scalar_lea.vmem %s3, %s171
      %s173 = smul.u32 64, %s14
      %v175 = vld [vmem:[%s166] sm:$0xf]
      %v176 = vld [vmem:[%s166 + $0x4] sm:$0xf]
      %v177 = vld [vmem:[%s166 + $0x8] sm:$0xf]
      %v178 = vld [vmem:[%s166 + $0xc] sm:$0xf]
      %v179 = vld [vmem:[%s166 + $0x10] sm:$0xf]
      %v180 = vld [vmem:[%s166 + $0x14] sm:$0xf]
      %v181 = vld [vmem:[%s166 + $0x18] sm:$0xf]
      %v182 = vld [vmem:[%s166 + $0x1c] sm:$0xf]
      %v183 = vld [vmem:[%s166 + $0x20] sm:$0xf]
      %v184 = vld [vmem:[%s166 + $0x24] sm:$0xf]
      %v185 = vld [vmem:[%s166 + $0x28] sm:$0xf]
      %v186 = vld [vmem:[%s166 + $0x2c] sm:$0xf]
      %v187 = vld [vmem:[%s166 + $0x30] sm:$0xf]
      %v188 = vld [vmem:[%s166 + $0x34] sm:$0xf]
      %v189 = vld [vmem:[%s166 + $0x38] sm:$0xf]
      %v190 = vld [vmem:[%s166 + $0x3c] sm:$0xf]
      %v191 = vld [vmem:[%s166 + $0x40] sm:$0xf]
      %v192 = vld [vmem:[%s166 + $0x44] sm:$0xf]
      %v193 = vld [vmem:[%s166 + $0x48] sm:$0xf]
      %v194 = vld [vmem:[%s166 + $0x4c] sm:$0xf]
      %v195 = vld [vmem:[%s166 + $0x50] sm:$0xf]
      %v196 = vld [vmem:[%s166 + $0x54] sm:$0xf]
      %v197 = vld [vmem:[%s166 + $0x58] sm:$0xf]
      %v198 = vld [vmem:[%s166 + $0x5c] sm:$0xf]
      %v199 = vld [vmem:[%s166 + $0x60] sm:$0xf]
      %v200 = vld [vmem:[%s166 + $0x64] sm:$0xf]
      %v201 = vld [vmem:[%s166 + $0x68] sm:$0xf]
      %v202 = vld [vmem:[%s166 + $0x6c] sm:$0xf]
      %v203 = vld [vmem:[%s166 + $0x70] sm:$0xf]
      %v204 = vld [vmem:[%s166 + $0x74] sm:$0xf]
      %v205 = vld [vmem:[%s166 + $0x78] sm:$0xf]
      %v206 = vld [vmem:[%s166 + $0x7c] sm:$0xf]
      %v207 = vld [vmem:[%s166 + $0x80] sm:$0xf]
      %v208 = vld [vmem:[%s166 + $0x84] sm:$0xf]
      %v209 = vld [vmem:[%s166 + $0x88] sm:$0xf]
      %v210 = vld [vmem:[%s166 + $0x8c] sm:$0xf]
      %v211 = vld [vmem:[%s166 + $0x90] sm:$0xf]
      %v212 = vld [vmem:[%s166 + $0x94] sm:$0xf]
      %v213 = vld [vmem:[%s166 + $0x98] sm:$0xf]
      %v214 = vld [vmem:[%s166 + $0x9c] sm:$0xf]
      %v215 = vld [vmem:[%s166 + $0xa0] sm:$0xf]
      %v216 = vld [vmem:[%s166 + $0xa4] sm:$0xf]
      %v217 = vld [vmem:[%s166 + $0xa8] sm:$0xf]
      %v218 = vld [vmem:[%s166 + $0xac] sm:$0xf]
      %v219 = vld [vmem:[%s166 + $0xb0] sm:$0xf]
      %v220 = vld [vmem:[%s166 + $0xb4] sm:$0xf]
      %v221 = vld [vmem:[%s166 + $0xb8] sm:$0xf]
      %v222 = vld [vmem:[%s166 + $0xbc] sm:$0xf]
      %v223 = vld [vmem:[%s166 + $0xc0] sm:$0xf]
      %v224 = vld [vmem:[%s166 + $0xc4] sm:$0xf]
      %v225 = vld [vmem:[%s166 + $0xc8] sm:$0xf]
      %v226 = vld [vmem:[%s166 + $0xcc] sm:$0xf]
      %v227 = vld [vmem:[%s166 + $0xd0] sm:$0xf]
      %v228 = vld [vmem:[%s166 + $0xd4] sm:$0xf]
      %v229 = vld [vmem:[%s166 + $0xd8] sm:$0xf]
      %v230 = vld [vmem:[%s166 + $0xdc] sm:$0xf]
      %v231 = vld [vmem:[%s166 + $0xe0] sm:$0xf]
      %v232 = vld [vmem:[%s166 + $0xe4] sm:$0xf]
      %v233 = vld [vmem:[%s166 + $0xe8] sm:$0xf]
      %v234 = vld [vmem:[%s166 + $0xec] sm:$0xf]
      %v235 = vld [vmem:[%s166 + $0xf0] sm:$0xf]
      %v236 = vld [vmem:[%s166 + $0xf4] sm:$0xf]
      %v237 = vld [vmem:[%s166 + $0xf8] sm:$0xf]
      %v238 = vld [vmem:[%s166 + $0xfc] sm:$0xf]
      %v239 = vld [vmem:[%s1] sm:$0xf]
      %v240 = vld [vmem:[%s1 + $0x4] sm:$0xf]
      %v241 = vld [vmem:[%s1 + $0x8] sm:$0xf]
      %v242 = vld [vmem:[%s1 + $0xc] sm:$0x3]
      %v243 = vld [vmem:[%s2] sm:$0x1]
      %v245 = vlaneseq
      %v246 = vshrl.u32 %v245, 7
      %v247 = vsub.s32 0, %v246
      %v248 = vrot.slane %v243, %v247
      %v314 = vunpack.c.l.b16 %v175
      %v315 = vunpack.c.l.b16 %v176
      %v316 = vunpack.c.l.b16 %v177
      %v317 = vunpack.c.l.b16 %v178
      %v318 = vunpack.c.l.b16 %v179
      %v319 = vunpack.c.l.b16 %v180
      %v320 = vunpack.c.l.b16 %v181
      %v321 = vunpack.c.l.b16 %v182
      %v322 = vunpack.c.l.b16 %v183
      %v323 = vunpack.c.l.b16 %v184
      %v324 = vunpack.c.l.b16 %v185
      %v325 = vunpack.c.l.b16 %v186
      %v326 = vunpack.c.l.b16 %v187
      %v327 = vunpack.c.l.b16 %v188
      %v328 = vunpack.c.l.b16 %v189
      %v329 = vunpack.c.l.b16 %v190
      %v330 = vunpack.c.l.b16 %v191
      %v331 = vunpack.c.l.b16 %v192
      %v332 = vunpack.c.l.b16 %v193
      %v333 = vunpack.c.l.b16 %v194
      %v334 = vunpack.c.l.b16 %v195
      %v335 = vunpack.c.l.b16 %v196
      %v336 = vunpack.c.l.b16 %v197
      %v337 = vunpack.c.l.b16 %v198
      %v338 = vunpack.c.l.b16 %v199
      %v339 = vunpack.c.l.b16 %v200
      %v340 = vunpack.c.l.b16 %v201
      %v341 = vunpack.c.l.b16 %v202
      %v342 = vunpack.c.l.b16 %v203
      %v343 = vunpack.c.l.b16 %v204
      %v344 = vunpack.c.l.b16 %v205
      %v345 = vunpack.c.l.b16 %v206
      %v346 = vunpack.c.l.b16 %v207
      %v347 = vunpack.c.l.b16 %v208
      %v348 = vunpack.c.l.b16 %v209
      %v349 = vunpack.c.l.b16 %v210
      %v350 = vunpack.c.l.b16 %v211
      %v351 = vunpack.c.l.b16 %v212
      %v352 = vunpack.c.l.b16 %v213
      %v353 = vunpack.c.l.b16 %v214
      %v354 = vunpack.c.l.b16 %v215
      %v355 = vunpack.c.l.b16 %v216
      %v356 = vunpack.c.l.b16 %v217
      %v357 = vunpack.c.l.b16 %v218
      %v358 = vunpack.c.l.b16 %v219
      %v359 = vunpack.c.l.b16 %v220
      %v360 = vunpack.c.l.b16 %v221
      %v361 = vunpack.c.l.b16 %v222
      %v362 = vunpack.c.l.b16 %v223
      %v363 = vunpack.c.l.b16 %v224
      %v364 = vunpack.c.l.b16 %v225
      %v365 = vunpack.c.l.b16 %v226
      %v366 = vunpack.c.l.b16 %v227
      %v367 = vunpack.c.l.b16 %v228
      %v368 = vunpack.c.l.b16 %v229
      %v369 = vunpack.c.l.b16 %v230
      %v370 = vunpack.c.l.b16 %v231
      %v371 = vunpack.c.l.b16 %v232
      %v372 = vunpack.c.l.b16 %v233
      %v373 = vunpack.c.l.b16 %v234
      %v374 = vunpack.c.l.b16 %v235
      %v375 = vunpack.c.l.b16 %v236
      %v376 = vunpack.c.l.b16 %v237
      %v377 = vunpack.c.l.b16 %v238
      %v378 = vpack.c.b16 %v315, %v314
      %v379 = vpack.c.b16 %v317, %v316
      %v380 = vpack.c.b16 %v319, %v318
      %v381 = vpack.c.b16 %v321, %v320
      %v382 = vpack.c.b16 %v323, %v322
      %v383 = vpack.c.b16 %v325, %v324
      %v384 = vpack.c.b16 %v327, %v326
      %v385 = vpack.c.b16 %v329, %v328
      %v386 = vpack.c.b16 %v331, %v330
      %v387 = vpack.c.b16 %v333, %v332
      %v388 = vpack.c.b16 %v335, %v334
      %v389 = vpack.c.b16 %v337, %v336
      %v390 = vpack.c.b16 %v339, %v338
      %v391 = vpack.c.b16 %v341, %v340
      %v392 = vpack.c.b16 %v343, %v342
      %v393 = vpack.c.b16 %v345, %v344
      %v394 = vpack.c.b16 %v347, %v346
      %v395 = vpack.c.b16 %v349, %v348
      %v396 = vpack.c.b16 %v351, %v350
      %v397 = vpack.c.b16 %v353, %v352
      %v398 = vpack.c.b16 %v355, %v354
      %v399 = vpack.c.b16 %v357, %v356
      %v400 = vpack.c.b16 %v359, %v358
      %v401 = vpack.c.b16 %v361, %v360
      %v402 = vpack.c.b16 %v363, %v362
      %v403 = vpack.c.b16 %v365, %v364
      %v404 = vpack.c.b16 %v367, %v366
      %v405 = vpack.c.b16 %v369, %v368
      %v406 = vpack.c.b16 %v371, %v370
      %v407 = vpack.c.b16 %v373, %v372
      %v408 = vpack.c.b16 %v375, %v374
      %v409 = vpack.c.b16 %v377, %v376
      %v414 = vunpack.c.l.b16 %v239
      %v415 = vunpack.c.l.b16 %v240
      %v416 = vunpack.c.l.b16 %v241
      %v417 = vunpack.c.l.b16 %v242
      %v418 = vpack.c.b16 %v415, %v414
      %v419 = vpack.c.b16 %v417, %v416
      %vm421 = vcmask 220160
      %v423 = vsel %vm421, %v378, 0
      %v426 = vsel %vm421, %v379, 0
      %v429 = vsel %vm421, %v380, 0
      %v432 = vsel %vm421, %v381, 0
      %v435 = vsel %vm421, %v382, 0
      %v438 = vsel %vm421, %v383, 0
      %v441 = vsel %vm421, %v384, 0
      %v444 = vsel %vm421, %v385, 0
      %v447 = vsel %vm421, %v386, 0
      %v450 = vsel %vm421, %v387, 0
      %v453 = vsel %vm421, %v388, 0
      %v456 = vsel %vm421, %v389, 0
      %v459 = vsel %vm421, %v390, 0
      %v462 = vsel %vm421, %v391, 0
      %v465 = vsel %vm421, %v392, 0
      %v468 = vsel %vm421, %v393, 0
      %v471 = vsel %vm421, %v394, 0
      %v474 = vsel %vm421, %v395, 0
      %v477 = vsel %vm421, %v396, 0
      %v480 = vsel %vm421, %v397, 0
      %v483 = vsel %vm421, %v398, 0
      %v486 = vsel %vm421, %v399, 0
      %v489 = vsel %vm421, %v400, 0
      %v492 = vsel %vm421, %v401, 0
      %v495 = vsel %vm421, %v402, 0
      %v498 = vsel %vm421, %v403, 0
      %v501 = vsel %vm421, %v404, 0
      %v504 = vsel %vm421, %v405, 0
      %v507 = vsel %vm421, %v406, 0
      %v510 = vsel %vm421, %v407, 0
      %v513 = vsel %vm421, %v408, 0
      %v516 = vsel %vm421, %v409, 0
      %vm518 = vcmask 1044480
      %vm519 = vcmask 1045504
      %v520 = vsel %vm518, 4294967295, 65535
      %v521 = vsel %vm519, %v520, 0
      %v523 = vand.u32 %v419, %v521
      %525 = vmatprep.subr.bf16.mxu0 0
      %526 = vmatpush1.bf16.msra.mxu0 0
      %527 = vmatprep.subr.bf16.mxu0 0
      %528 = vmatpush1.bf16.msra.mxu0 0
      %529 = vmatprep.subr.bf16.mxu0 0
      %530 = vmatpush1.bf16.msra.mxu0 0
      %531 = vmatprep.subr.bf16.mxu0 0
      %532 = vmatpush1.bf16.msra.mxu0 0
      %533 = vmatprep.subr.bf16.mxu0 0
      %534 = vmatpush1.bf16.msra.mxu0 0
      %535 = vmatprep.subr.bf16.mxu0 0
      %536 = vmatpush1.bf16.msra.mxu0 0
      %537 = vmatprep.subr.bf16.mxu0 0
      %538 = vmatpush1.bf16.msra.mxu0 %v523
      %539 = vmatprep.subr.bf16.mxu0 0
      %540 = vmatpush1.bf16.msra.mxu0 %v418
      %541 = vmatprep.subr.bf16.mxu0 0
      %542 = vmatpush2.bf16.msra.mxu0 0
      %543 = vmatprep.subr.bf16.mxu0 0
      %544 = vmatpush2.bf16.msra.mxu0 0
      %545 = vmatprep.subr.bf16.mxu0 0
      %546 = vmatpush2.bf16.msra.mxu0 0
      %547 = vmatprep.subr.bf16.mxu0 0
      %548 = vmatpush2.bf16.msra.mxu0 0
      %549 = vmatprep.subr.bf16.mxu0 0
      %550 = vmatpush2.bf16.msra.mxu0 0
      %551 = vmatprep.subr.bf16.mxu0 0
      %552 = vmatpush2.bf16.msra.mxu0 0
      %553 = vmatprep.subr.bf16.mxu0 0
      %554 = vmatpush2.bf16.msra.mxu0 0
      %555 = vmatprep.subr.bf16.mxu0 0
      %556 = vmatpush2.bf16.msra.mxu0 0
      %557 = vmatprep.mubr.bf16.mxu0 0
      %558 = vmatmul.mubr.bf16.gmra.mxu0 %v423
      %v559 = vpop.f32.mrf.mxu0
      %v560 = vadd.f32 %v248, %v559
      %v561 = vpop.f32.mrf.mxu0
      %v562 = vpop.f32.mrf.mxu0
      %v563 = vadd.f32 %v248, %v562
      %v564 = vpop.f32.mrf.mxu0
      %565 = vmatprep.mubr.bf16.mxu0 0
      %566 = vmatmul.mubr.bf16.gmra.mxu0 %v426
      %v567 = vpop.f32.mrf.mxu0
      %v568 = vadd.f32 %v248, %v567
      %v569 = vpop.f32.mrf.mxu0
      %v570 = vpop.f32.mrf.mxu0
      %v571 = vadd.f32 %v248, %v570
      %v572 = vpop.f32.mrf.mxu0
      %573 = vmatprep.mubr.bf16.mxu0 0
      %574 = vmatmul.mubr.bf16.gmra.mxu0 %v429
      %v575 = vpop.f32.mrf.mxu0
      %v576 = vadd.f32 %v248, %v575
      %v577 = vpop.f32.mrf.mxu0
      %v578 = vpop.f32.mrf.mxu0
      %v579 = vadd.f32 %v248, %v578
      %v580 = vpop.f32.mrf.mxu0
      %581 = vmatprep.mubr.bf16.mxu0 0
      %582 = vmatmul.mubr.bf16.gmra.mxu0 %v432
      %v583 = vpop.f32.mrf.mxu0
      %v584 = vadd.f32 %v248, %v583
      %v585 = vpop.f32.mrf.mxu0
      %v586 = vpop.f32.mrf.mxu0
      %v587 = vadd.f32 %v248, %v586
      %v588 = vpop.f32.mrf.mxu0
      %589 = vmatprep.mubr.bf16.mxu0 0
      %590 = vmatmul.mubr.bf16.gmra.mxu0 %v435
      %v591 = vpop.f32.mrf.mxu0
      %v592 = vadd.f32 %v248, %v591
      %v593 = vpop.f32.mrf.mxu0
      %v594 = vpop.f32.mrf.mxu0
      %v595 = vadd.f32 %v248, %v594
      %v596 = vpop.f32.mrf.mxu0
      %597 = vmatprep.mubr.bf16.mxu0 0
      %598 = vmatmul.mubr.bf16.gmra.mxu0 %v438
      %v599 = vpop.f32.mrf.mxu0
      %v600 = vadd.f32 %v248, %v599
      %v601 = vpop.f32.mrf.mxu0
      %v602 = vpop.f32.mrf.mxu0
      %v603 = vadd.f32 %v248, %v602
      %v604 = vpop.f32.mrf.mxu0
      %605 = vmatprep.mubr.bf16.mxu0 0
      %606 = vmatmul.mubr.bf16.gmra.mxu0 %v441
      %v607 = vpop.f32.mrf.mxu0
      %v608 = vadd.f32 %v248, %v607
      %v609 = vpop.f32.mrf.mxu0
      %v610 = vpop.f32.mrf.mxu0
      %v611 = vadd.f32 %v248, %v610
      %v612 = vpop.f32.mrf.mxu0
      %613 = vmatprep.mubr.bf16.mxu0 0
      %614 = vmatmul.mubr.bf16.gmra.mxu0 %v444
      %v615 = vpop.f32.mrf.mxu0
      %v616 = vadd.f32 %v248, %v615
      %v617 = vpop.f32.mrf.mxu0
      %v618 = vpop.f32.mrf.mxu0
      %v619 = vadd.f32 %v248, %v618
      %v620 = vpop.f32.mrf.mxu0
      %621 = vmatprep.mubr.bf16.mxu0 0
      %622 = vmatmul.mubr.bf16.gmra.mxu0 %v447
      %v623 = vpop.f32.mrf.mxu0
      %v624 = vadd.f32 %v248, %v623
      %v625 = vpop.f32.mrf.mxu0
      %v626 = vpop.f32.mrf.mxu0
      %v627 = vadd.f32 %v248, %v626
      %v628 = vpop.f32.mrf.mxu0
      %629 = vmatprep.mubr.bf16.mxu0 0
      %630 = vmatmul.mubr.bf16.gmra.mxu0 %v450
      %v631 = vpop.f32.mrf.mxu0
      %v632 = vadd.f32 %v248, %v631
      %v633 = vpop.f32.mrf.mxu0
      %v634 = vpop.f32.mrf.mxu0
      %v635 = vadd.f32 %v248, %v634
      %v636 = vpop.f32.mrf.mxu0
      %637 = vmatprep.mubr.bf16.mxu0 0
      %638 = vmatmul.mubr.bf16.gmra.mxu0 %v453
      %v639 = vpop.f32.mrf.mxu0
      %v640 = vadd.f32 %v248, %v639
      %v641 = vpop.f32.mrf.mxu0
      %v642 = vpop.f32.mrf.mxu0
      %v643 = vadd.f32 %v248, %v642
      %v644 = vpop.f32.mrf.mxu0
      %645 = vmatprep.mubr.bf16.mxu0 0
      %646 = vmatmul.mubr.bf16.gmra.mxu0 %v456
      %v647 = vpop.f32.mrf.mxu0
      %v648 = vadd.f32 %v248, %v647
      %v649 = vpop.f32.mrf.mxu0
      %v650 = vpop.f32.mrf.mxu0
      %v651 = vadd.f32 %v248, %v650
      %v652 = vpop.f32.mrf.mxu0
      %653 = vmatprep.mubr.bf16.mxu0 0
      %654 = vmatmul.mubr.bf16.gmra.mxu0 %v459
      %v655 = vpop.f32.mrf.mxu0
      %v656 = vadd.f32 %v248, %v655
      %v657 = vpop.f32.mrf.mxu0
      %v658 = vpop.f32.mrf.mxu0
      %v659 = vadd.f32 %v248, %v658
      %v660 = vpop.f32.mrf.mxu0
      %661 = vmatprep.mubr.bf16.mxu0 0
      %662 = vmatmul.mubr.bf16.gmra.mxu0 %v462
      %v663 = vpop.f32.mrf.mxu0
      %v664 = vadd.f32 %v248, %v663
      %v665 = vpop.f32.mrf.mxu0
      %v666 = vpop.f32.mrf.mxu0
      %v667 = vadd.f32 %v248, %v666
      %v668 = vpop.f32.mrf.mxu0
      %669 = vmatprep.mubr.bf16.mxu0 0
      %670 = vmatmul.mubr.bf16.gmra.mxu0 %v465
      %v671 = vpop.f32.mrf.mxu0
      %v672 = vadd.f32 %v248, %v671
      %v673 = vpop.f32.mrf.mxu0
      %v674 = vpop.f32.mrf.mxu0
      %v675 = vadd.f32 %v248, %v674
      %v676 = vpop.f32.mrf.mxu0
      %677 = vmatprep.mubr.bf16.mxu0 0
      %678 = vmatmul.mubr.bf16.gmra.mxu0 %v468
      %v679 = vpop.f32.mrf.mxu0
      %v680 = vadd.f32 %v248, %v679
      %v681 = vpop.f32.mrf.mxu0
      %v682 = vpop.f32.mrf.mxu0
      %v683 = vadd.f32 %v248, %v682
      %v684 = vpop.f32.mrf.mxu0
      %685 = vmatprep.mubr.bf16.mxu0 0
      %686 = vmatmul.mubr.bf16.gmra.mxu0 %v471
      %v687 = vpop.f32.mrf.mxu0
      %v688 = vadd.f32 %v248, %v687
      %v689 = vpop.f32.mrf.mxu0
      %v690 = vpop.f32.mrf.mxu0
      %v691 = vadd.f32 %v248, %v690
      %v692 = vpop.f32.mrf.mxu0
      %693 = vmatprep.mubr.bf16.mxu0 0
      %694 = vmatmul.mubr.bf16.gmra.mxu0 %v474
      %v695 = vpop.f32.mrf.mxu0
      %v696 = vadd.f32 %v248, %v695
      %v697 = vpop.f32.mrf.mxu0
      %v698 = vpop.f32.mrf.mxu0
      %v699 = vadd.f32 %v248, %v698
      %v700 = vpop.f32.mrf.mxu0
      %701 = vmatprep.mubr.bf16.mxu0 0
      %702 = vmatmul.mubr.bf16.gmra.mxu0 %v477
      %v703 = vpop.f32.mrf.mxu0
      %v704 = vadd.f32 %v248, %v703
      %v705 = vpop.f32.mrf.mxu0
      %v706 = vpop.f32.mrf.mxu0
      %v707 = vadd.f32 %v248, %v706
      %v708 = vpop.f32.mrf.mxu0
      %709 = vmatprep.mubr.bf16.mxu0 0
      %710 = vmatmul.mubr.bf16.gmra.mxu0 %v480
      %v711 = vpop.f32.mrf.mxu0
      %v712 = vadd.f32 %v248, %v711
      %v713 = vpop.f32.mrf.mxu0
      %v714 = vpop.f32.mrf.mxu0
      %v715 = vadd.f32 %v248, %v714
      %v716 = vpop.f32.mrf.mxu0
      %717 = vmatprep.mubr.bf16.mxu0 0
      %718 = vmatmul.mubr.bf16.gmra.mxu0 %v483
      %v719 = vpop.f32.mrf.mxu0
      %v720 = vadd.f32 %v248, %v719
      %v721 = vpop.f32.mrf.mxu0
      %v722 = vpop.f32.mrf.mxu0
      %v723 = vadd.f32 %v248, %v722
      %v724 = vpop.f32.mrf.mxu0
      %725 = vmatprep.mubr.bf16.mxu0 0
      %726 = vmatmul.mubr.bf16.gmra.mxu0 %v486
      %v727 = vpop.f32.mrf.mxu0
      %v728 = vadd.f32 %v248, %v727
      %v729 = vpop.f32.mrf.mxu0
      %v730 = vpop.f32.mrf.mxu0
      %v731 = vadd.f32 %v248, %v730
      %v732 = vpop.f32.mrf.mxu0
      %733 = vmatprep.mubr.bf16.mxu0 0
      %734 = vmatmul.mubr.bf16.gmra.mxu0 %v489
      %v735 = vpop.f32.mrf.mxu0
      %v736 = vadd.f32 %v248, %v735
      %v737 = vpop.f32.mrf.mxu0
      %v738 = vpop.f32.mrf.mxu0
      %v739 = vadd.f32 %v248, %v738
      %v740 = vpop.f32.mrf.mxu0
      %741 = vmatprep.mubr.bf16.mxu0 0
      %742 = vmatmul.mubr.bf16.gmra.mxu0 %v492
      %v743 = vpop.f32.mrf.mxu0
      %v744 = vadd.f32 %v248, %v743
      %v745 = vpop.f32.mrf.mxu0
      %v746 = vpop.f32.mrf.mxu0
      %v747 = vadd.f32 %v248, %v746
      %v748 = vpop.f32.mrf.mxu0
      %749 = vmatprep.mubr.bf16.mxu0 0
      %750 = vmatmul.mubr.bf16.gmra.mxu0 %v495
      %v751 = vpop.f32.mrf.mxu0
      %v752 = vadd.f32 %v248, %v751
      %v753 = vpop.f32.mrf.mxu0
      %v754 = vpop.f32.mrf.mxu0
      %v755 = vadd.f32 %v248, %v754
      %v756 = vpop.f32.mrf.mxu0
      %757 = vmatprep.mubr.bf16.mxu0 0
      %758 = vmatmul.mubr.bf16.gmra.mxu0 %v498
      %v759 = vpop.f32.mrf.mxu0
      %v760 = vadd.f32 %v248, %v759
      %v761 = vpop.f32.mrf.mxu0
      %v762 = vpop.f32.mrf.mxu0
      %v763 = vadd.f32 %v248, %v762
      %v764 = vpop.f32.mrf.mxu0
      %765 = vmatprep.mubr.bf16.mxu0 0
      %766 = vmatmul.mubr.bf16.gmra.mxu0 %v501
      %v767 = vpop.f32.mrf.mxu0
      %v768 = vadd.f32 %v248, %v767
      %v769 = vpop.f32.mrf.mxu0
      %v770 = vpop.f32.mrf.mxu0
      %v771 = vadd.f32 %v248, %v770
      %v772 = vpop.f32.mrf.mxu0
      %773 = vmatprep.mubr.bf16.mxu0 0
      %774 = vmatmul.mubr.bf16.gmra.mxu0 %v504
      %v775 = vpop.f32.mrf.mxu0
      %v776 = vadd.f32 %v248, %v775
      %v777 = vpop.f32.mrf.mxu0
      %v778 = vpop.f32.mrf.mxu0
      %v779 = vadd.f32 %v248, %v778
      %v780 = vpop.f32.mrf.mxu0
      %781 = vmatprep.mubr.bf16.mxu0 0
      %782 = vmatmul.mubr.bf16.gmra.mxu0 %v507
      %v783 = vpop.f32.mrf.mxu0
      %v784 = vadd.f32 %v248, %v783
      %v785 = vpop.f32.mrf.mxu0
      %v786 = vpop.f32.mrf.mxu0
      %v787 = vadd.f32 %v248, %v786
      %v788 = vpop.f32.mrf.mxu0
      %789 = vmatprep.mubr.bf16.mxu0 0
      %790 = vmatmul.mubr.bf16.gmra.mxu0 %v510
      %v791 = vpop.f32.mrf.mxu0
      %v792 = vadd.f32 %v248, %v791
      %v793 = vpop.f32.mrf.mxu0
      %v794 = vpop.f32.mrf.mxu0
      %v795 = vadd.f32 %v248, %v794
      %v796 = vpop.f32.mrf.mxu0
      %797 = vmatprep.mubr.bf16.mxu0 0
      %798 = vmatmul.mubr.bf16.gmra.mxu0 %v513
      %v799 = vpop.f32.mrf.mxu0
      %v800 = vadd.f32 %v248, %v799
      %v801 = vpop.f32.mrf.mxu0
      %v802 = vpop.f32.mrf.mxu0
      %v803 = vadd.f32 %v248, %v802
      %v804 = vpop.f32.mrf.mxu0
      %805 = vmatprep.mubr.bf16.mxu0 0
      %806 = vmatmul.mubr.bf16.gmra.mxu0 %v516
      %v807 = vpop.f32.mrf.mxu0
      %v808 = vadd.f32 %v248, %v807
      %v809 = vpop.f32.mrf.mxu0
      %v810 = vpop.f32.mrf.mxu0
      %v811 = vadd.f32 %v248, %v810
      %v812 = vpop.f32.mrf.mxu0
      %813 = vdwg.mxu0
      %v814 = vmax.f32 %v560, 0.0
      %v815 = vmax.f32 %v563, 0.0
      %v816 = vmax.f32 %v568, 0.0
      %v817 = vmax.f32 %v571, 0.0
      %v818 = vmax.f32 %v576, 0.0
      %v819 = vmax.f32 %v579, 0.0
      %v820 = vmax.f32 %v584, 0.0
      %v821 = vmax.f32 %v587, 0.0
      %v822 = vmax.f32 %v592, 0.0
      %v823 = vmax.f32 %v595, 0.0
      %v824 = vmax.f32 %v600, 0.0
      %v825 = vmax.f32 %v603, 0.0
      %v826 = vmax.f32 %v608, 0.0
      %v827 = vmax.f32 %v611, 0.0
      %v828 = vmax.f32 %v616, 0.0
      %v829 = vmax.f32 %v619, 0.0
      %v830 = vmax.f32 %v624, 0.0
      %v831 = vmax.f32 %v627, 0.0
      %v832 = vmax.f32 %v632, 0.0
      %v833 = vmax.f32 %v635, 0.0
      %v834 = vmax.f32 %v640, 0.0
      %v835 = vmax.f32 %v643, 0.0
      %v836 = vmax.f32 %v648, 0.0
      %v837 = vmax.f32 %v651, 0.0
      %v838 = vmax.f32 %v656, 0.0
      %v839 = vmax.f32 %v659, 0.0
      %v840 = vmax.f32 %v664, 0.0
      %v841 = vmax.f32 %v667, 0.0
      %v842 = vmax.f32 %v672, 0.0
      %v843 = vmax.f32 %v675, 0.0
      %v844 = vmax.f32 %v680, 0.0
      %v845 = vmax.f32 %v683, 0.0
      %v846 = vmax.f32 %v688, 0.0
      %v847 = vmax.f32 %v691, 0.0
      %v848 = vmax.f32 %v696, 0.0
      %v849 = vmax.f32 %v699, 0.0
      %v850 = vmax.f32 %v704, 0.0
      %v851 = vmax.f32 %v707, 0.0
      %v852 = vmax.f32 %v712, 0.0
      %v853 = vmax.f32 %v715, 0.0
      %v854 = vmax.f32 %v720, 0.0
      %v855 = vmax.f32 %v723, 0.0
      %v856 = vmax.f32 %v728, 0.0
      %v857 = vmax.f32 %v731, 0.0
      %v858 = vmax.f32 %v736, 0.0
      %v859 = vmax.f32 %v739, 0.0
      %v860 = vmax.f32 %v744, 0.0
      %v861 = vmax.f32 %v747, 0.0
      %v862 = vmax.f32 %v752, 0.0
      %v863 = vmax.f32 %v755, 0.0
      %v864 = vmax.f32 %v760, 0.0
      %v865 = vmax.f32 %v763, 0.0
      %v866 = vmax.f32 %v768, 0.0
      %v867 = vmax.f32 %v771, 0.0
      %v868 = vmax.f32 %v776, 0.0
      %v869 = vmax.f32 %v779, 0.0
      %v870 = vmax.f32 %v784, 0.0
      %v871 = vmax.f32 %v787, 0.0
      %v872 = vmax.f32 %v792, 0.0
      %v873 = vmax.f32 %v795, 0.0
      %v874 = vmax.f32 %v800, 0.0
      %v875 = vmax.f32 %v803, 0.0
      %v876 = vmax.f32 %v808, 0.0
      %v877 = vmax.f32 %v811, 0.0
      %v878 = vpack.c.bf16 %v815, %v814
      %v879 = vpack.c.bf16 %v817, %v816
      %v880 = vpack.c.bf16 %v819, %v818
      %v881 = vpack.c.bf16 %v821, %v820
      %v882 = vpack.c.bf16 %v823, %v822
      %v883 = vpack.c.bf16 %v825, %v824
      %v884 = vpack.c.bf16 %v827, %v826
      %v885 = vpack.c.bf16 %v829, %v828
      %v886 = vpack.c.bf16 %v831, %v830
      %v887 = vpack.c.bf16 %v833, %v832
      %v888 = vpack.c.bf16 %v835, %v834
      %v889 = vpack.c.bf16 %v837, %v836
      %v890 = vpack.c.bf16 %v839, %v838
      %v891 = vpack.c.bf16 %v841, %v840
      %v892 = vpack.c.bf16 %v843, %v842
      %v893 = vpack.c.bf16 %v845, %v844
      %v894 = vpack.c.bf16 %v847, %v846
      %v895 = vpack.c.bf16 %v849, %v848
      %v896 = vpack.c.bf16 %v851, %v850
      %v897 = vpack.c.bf16 %v853, %v852
      %v898 = vpack.c.bf16 %v855, %v854
      %v899 = vpack.c.bf16 %v857, %v856
      %v900 = vpack.c.bf16 %v859, %v858
      %v901 = vpack.c.bf16 %v861, %v860
      %v902 = vpack.c.bf16 %v863, %v862
      %v903 = vpack.c.bf16 %v865, %v864
      %v904 = vpack.c.bf16 %v867, %v866
      %v905 = vpack.c.bf16 %v869, %v868
      %v906 = vpack.c.bf16 %v871, %v870
      %v907 = vpack.c.bf16 %v873, %v872
      %v908 = vpack.c.bf16 %v875, %v874
      %v909 = vpack.c.bf16 %v877, %v876
      %v942 = vunpack.c.l.b16 %v878
      %v943 = vunpack.c.h.b16 %v878
      %v944 = vunpack.c.l.b16 %v879
      %v945 = vunpack.c.h.b16 %v879
      %v946 = vunpack.c.l.b16 %v880
      %v947 = vunpack.c.h.b16 %v880
      %v948 = vunpack.c.l.b16 %v881
      %v949 = vunpack.c.h.b16 %v881
      %v950 = vunpack.c.l.b16 %v882
      %v951 = vunpack.c.h.b16 %v882
      %v952 = vunpack.c.l.b16 %v883
      %v953 = vunpack.c.h.b16 %v883
      %v954 = vunpack.c.l.b16 %v884
      %v955 = vunpack.c.h.b16 %v884
      %v956 = vunpack.c.l.b16 %v885
      %v957 = vunpack.c.h.b16 %v885
      %v958 = vunpack.c.l.b16 %v886
      %v959 = vunpack.c.h.b16 %v886
      %v960 = vunpack.c.l.b16 %v887
      %v961 = vunpack.c.h.b16 %v887
      %v962 = vunpack.c.l.b16 %v888
      %v963 = vunpack.c.h.b16 %v888
      %v964 = vunpack.c.l.b16 %v889
      %v965 = vunpack.c.h.b16 %v889
      %v966 = vunpack.c.l.b16 %v890
      %v967 = vunpack.c.h.b16 %v890
      %v968 = vunpack.c.l.b16 %v891
      %v969 = vunpack.c.h.b16 %v891
      %v970 = vunpack.c.l.b16 %v892
      %v971 = vunpack.c.h.b16 %v892
      %v972 = vunpack.c.l.b16 %v893
      %v973 = vunpack.c.h.b16 %v893
      %v974 = vunpack.c.l.b16 %v894
      %v975 = vunpack.c.h.b16 %v894
      %v976 = vunpack.c.l.b16 %v895
      %v977 = vunpack.c.h.b16 %v895
      %v978 = vunpack.c.l.b16 %v896
      %v979 = vunpack.c.h.b16 %v896
      %v980 = vunpack.c.l.b16 %v897
      %v981 = vunpack.c.h.b16 %v897
      %v982 = vunpack.c.l.b16 %v898
      %v983 = vunpack.c.h.b16 %v898
      %v984 = vunpack.c.l.b16 %v899
      %v985 = vunpack.c.h.b16 %v899
      %v986 = vunpack.c.l.b16 %v900
      %v987 = vunpack.c.h.b16 %v900
      %v988 = vunpack.c.l.b16 %v901
      %v989 = vunpack.c.h.b16 %v901
      %v990 = vunpack.c.l.b16 %v902
      %v991 = vunpack.c.h.b16 %v902
      %v992 = vunpack.c.l.b16 %v903
      %v993 = vunpack.c.h.b16 %v903
      %v994 = vunpack.c.l.b16 %v904
      %v995 = vunpack.c.h.b16 %v904
      %v996 = vunpack.c.l.b16 %v905
      %v997 = vunpack.c.h.b16 %v905
      %v998 = vunpack.c.l.b16 %v906
      %v999 = vunpack.c.h.b16 %v906
      %v1000 = vunpack.c.l.b16 %v907
      %v1001 = vunpack.c.h.b16 %v907
      %v1002 = vunpack.c.l.b16 %v908
      %v1003 = vunpack.c.h.b16 %v908
      %v1004 = vunpack.c.l.b16 %v909
      %v1005 = vunpack.c.h.b16 %v909
      %v1006 = vpack.c.b16 %v942, %v942
      %v1007 = vpack.c.b16 %v943, %v943
      %v1008 = vpack.c.b16 %v944, %v944
      %v1009 = vpack.c.b16 %v945, %v945
      %v1010 = vpack.c.b16 %v946, %v946
      %v1011 = vpack.c.b16 %v947, %v947
      %v1012 = vpack.c.b16 %v948, %v948
      %v1013 = vpack.c.b16 %v949, %v949
      %v1014 = vpack.c.b16 %v950, %v950
      %v1015 = vpack.c.b16 %v951, %v951
      %v1016 = vpack.c.b16 %v952, %v952
      %v1017 = vpack.c.b16 %v953, %v953
      %v1018 = vpack.c.b16 %v954, %v954
      %v1019 = vpack.c.b16 %v955, %v955
      %v1020 = vpack.c.b16 %v956, %v956
      %v1021 = vpack.c.b16 %v957, %v957
      %v1022 = vpack.c.b16 %v958, %v958
      %v1023 = vpack.c.b16 %v959, %v959
      %v1024 = vpack.c.b16 %v960, %v960
      %v1025 = vpack.c.b16 %v961, %v961
      %v1026 = vpack.c.b16 %v962, %v962
      %v1027 = vpack.c.b16 %v963, %v963
      %v1028 = vpack.c.b16 %v964, %v964
      %v1029 = vpack.c.b16 %v965, %v965
      %v1030 = vpack.c.b16 %v966, %v966
      %v1031 = vpack.c.b16 %v967, %v967
      %v1032 = vpack.c.b16 %v968, %v968
      %v1033 = vpack.c.b16 %v969, %v969
      %v1034 = vpack.c.b16 %v970, %v970
      %v1035 = vpack.c.b16 %v971, %v971
      %v1036 = vpack.c.b16 %v972, %v972
      %v1037 = vpack.c.b16 %v973, %v973
      %v1038 = vpack.c.b16 %v974, %v974
      %v1039 = vpack.c.b16 %v975, %v975
      %v1040 = vpack.c.b16 %v976, %v976
      %v1041 = vpack.c.b16 %v977, %v977
      %v1042 = vpack.c.b16 %v978, %v978
      %v1043 = vpack.c.b16 %v979, %v979
      %v1044 = vpack.c.b16 %v980, %v980
      %v1045 = vpack.c.b16 %v981, %v981
      %v1046 = vpack.c.b16 %v982, %v982
      %v1047 = vpack.c.b16 %v983, %v983
      %v1048 = vpack.c.b16 %v984, %v984
      %v1049 = vpack.c.b16 %v985, %v985
      %v1050 = vpack.c.b16 %v986, %v986
      %v1051 = vpack.c.b16 %v987, %v987
      %v1052 = vpack.c.b16 %v988, %v988
      %v1053 = vpack.c.b16 %v989, %v989
      %v1054 = vpack.c.b16 %v990, %v990
      %v1055 = vpack.c.b16 %v991, %v991
      %v1056 = vpack.c.b16 %v992, %v992
      %v1057 = vpack.c.b16 %v993, %v993
      %v1058 = vpack.c.b16 %v994, %v994
      %v1059 = vpack.c.b16 %v995, %v995
      %v1060 = vpack.c.b16 %v996, %v996
      %v1061 = vpack.c.b16 %v997, %v997
      %v1062 = vpack.c.b16 %v998, %v998
      %v1063 = vpack.c.b16 %v999, %v999
      %v1064 = vpack.c.b16 %v1000, %v1000
      %v1065 = vpack.c.b16 %v1001, %v1001
      %v1066 = vpack.c.b16 %v1002, %v1002
      %v1067 = vpack.c.b16 %v1003, %v1003
      %v1068 = vpack.c.b16 %v1004, %v1004
      %v1069 = vpack.c.b16 %v1005, %v1005
      %vm1134 = vcmask 60416
      %1135 = vst.msk [vmem:[%s172] sm:$0xf] %vm1134, %v1006
      %1136 = vst.msk [vmem:[%s172 + $0x4] sm:$0xf] %vm1134, %v1007
      %1137 = vst.msk [vmem:[%s172 + $0x8] sm:$0xf] %vm1134, %v1008
      %1138 = vst.msk [vmem:[%s172 + $0xc] sm:$0xf] %vm1134, %v1009
      %1139 = vst.msk [vmem:[%s172 + $0x10] sm:$0xf] %vm1134, %v1010
      %1140 = vst.msk [vmem:[%s172 + $0x14] sm:$0xf] %vm1134, %v1011
      %1141 = vst.msk [vmem:[%s172 + $0x18] sm:$0xf] %vm1134, %v1012
      %1142 = vst.msk [vmem:[%s172 + $0x1c] sm:$0xf] %vm1134, %v1013
      %1143 = vst.msk [vmem:[%s172 + $0x20] sm:$0xf] %vm1134, %v1014
      %1144 = vst.msk [vmem:[%s172 + $0x24] sm:$0xf] %vm1134, %v1015
      %1145 = vst.msk [vmem:[%s172 + $0x28] sm:$0xf] %vm1134, %v1016
      %1146 = vst.msk [vmem:[%s172 + $0x2c] sm:$0xf] %vm1134, %v1017
      %1147 = vst.msk [vmem:[%s172 + $0x30] sm:$0xf] %vm1134, %v1018
      %1148 = vst.msk [vmem:[%s172 + $0x34] sm:$0xf] %vm1134, %v1019
      %1149 = vst.msk [vmem:[%s172 + $0x38] sm:$0xf] %vm1134, %v1020
      %1150 = vst.msk [vmem:[%s172 + $0x3c] sm:$0xf] %vm1134, %v1021
      %1151 = vst.msk [vmem:[%s172 + $0x40] sm:$0xf] %vm1134, %v1022
      %1152 = vst.msk [vmem:[%s172 + $0x44] sm:$0xf] %vm1134, %v1023
      %1153 = vst.msk [vmem:[%s172 + $0x48] sm:$0xf] %vm1134, %v1024
      %1154 = vst.msk [vmem:[%s172 + $0x4c] sm:$0xf] %vm1134, %v1025
      %1155 = vst.msk [vmem:[%s172 + $0x50] sm:$0xf] %vm1134, %v1026
      %1156 = vst.msk [vmem:[%s172 + $0x54] sm:$0xf] %vm1134, %v1027
      %1157 = vst.msk [vmem:[%s172 + $0x58] sm:$0xf] %vm1134, %v1028
      %1158 = vst.msk [vmem:[%s172 + $0x5c] sm:$0xf] %vm1134, %v1029
      %1159 = vst.msk [vmem:[%s172 + $0x60] sm:$0xf] %vm1134, %v1030
      %1160 = vst.msk [vmem:[%s172 + $0x64] sm:$0xf] %vm1134, %v1031
      %1161 = vst.msk [vmem:[%s172 + $0x68] sm:$0xf] %vm1134, %v1032
      %1162 = vst.msk [vmem:[%s172 + $0x6c] sm:$0xf] %vm1134, %v1033
      %1163 = vst.msk [vmem:[%s172 + $0x70] sm:$0xf] %vm1134, %v1034
      %1164 = vst.msk [vmem:[%s172 + $0x74] sm:$0xf] %vm1134, %v1035
      %1165 = vst.msk [vmem:[%s172 + $0x78] sm:$0xf] %vm1134, %v1036
      %1166 = vst.msk [vmem:[%s172 + $0x7c] sm:$0xf] %vm1134, %v1037
      %1167 = vst.msk [vmem:[%s172 + $0x80] sm:$0xf] %vm1134, %v1038
      %1168 = vst.msk [vmem:[%s172 + $0x84] sm:$0xf] %vm1134, %v1039
      %1169 = vst.msk [vmem:[%s172 + $0x88] sm:$0xf] %vm1134, %v1040
      %1170 = vst.msk [vmem:[%s172 + $0x8c] sm:$0xf] %vm1134, %v1041
      %1171 = vst.msk [vmem:[%s172 + $0x90] sm:$0xf] %vm1134, %v1042
      %1172 = vst.msk [vmem:[%s172 + $0x94] sm:$0xf] %vm1134, %v1043
      %1173 = vst.msk [vmem:[%s172 + $0x98] sm:$0xf] %vm1134, %v1044
      %1174 = vst.msk [vmem:[%s172 + $0x9c] sm:$0xf] %vm1134, %v1045
      %1175 = vst.msk [vmem:[%s172 + $0xa0] sm:$0xf] %vm1134, %v1046
      %1176 = vst.msk [vmem:[%s172 + $0xa4] sm:$0xf] %vm1134, %v1047
      %1177 = vst.msk [vmem:[%s172 + $0xa8] sm:$0xf] %vm1134, %v1048
      %1178 = vst.msk [vmem:[%s172 + $0xac] sm:$0xf] %vm1134, %v1049
      %1179 = vst.msk [vmem:[%s172 + $0xb0] sm:$0xf] %vm1134, %v1050
      %1180 = vst.msk [vmem:[%s172 + $0xb4] sm:$0xf] %vm1134, %v1051
      %1181 = vst.msk [vmem:[%s172 + $0xb8] sm:$0xf] %vm1134, %v1052
      %1182 = vst.msk [vmem:[%s172 + $0xbc] sm:$0xf] %vm1134, %v1053
      %1183 = vst.msk [vmem:[%s172 + $0xc0] sm:$0xf] %vm1134, %v1054
      %1184 = vst.msk [vmem:[%s172 + $0xc4] sm:$0xf] %vm1134, %v1055
      %1185 = vst.msk [vmem:[%s172 + $0xc8] sm:$0xf] %vm1134, %v1056
      %1186 = vst.msk [vmem:[%s172 + $0xcc] sm:$0xf] %vm1134, %v1057
      %1187 = vst.msk [vmem:[%s172 + $0xd0] sm:$0xf] %vm1134, %v1058
      %1188 = vst.msk [vmem:[%s172 + $0xd4] sm:$0xf] %vm1134, %v1059
      %1189 = vst.msk [vmem:[%s172 + $0xd8] sm:$0xf] %vm1134, %v1060
      %1190 = vst.msk [vmem:[%s172 + $0xdc] sm:$0xf] %vm1134, %v1061
      %1191 = vst.msk [vmem:[%s172 + $0xe0] sm:$0xf] %vm1134, %v1062
      %1192 = vst.msk [vmem:[%s172 + $0xe4] sm:$0xf] %vm1134, %v1063
      %1193 = vst.msk [vmem:[%s172 + $0xe8] sm:$0xf] %vm1134, %v1064
      %1194 = vst.msk [vmem:[%s172 + $0xec] sm:$0xf] %vm1134, %v1065
      %1195 = vst.msk [vmem:[%s172 + $0xf0] sm:$0xf] %vm1134, %v1066
      %1196 = vst.msk [vmem:[%s172 + $0xf4] sm:$0xf] %vm1134, %v1067
      %1197 = vst.msk [vmem:[%s172 + $0xf8] sm:$0xf] %vm1134, %v1068
      %1198 = vst.msk [vmem:[%s172 + $0xfc] sm:$0xf] %vm1134, %v1069
      %s1199 = smul.u32 64, %s14
      %p1200 = scmp.lt.s32.totalorder %s1199, 255
      %s1201 = scalar_select %p1200, %s1199, 255
      %s1202 = smul.addr %s1201, 4
      %s1203 = scalar_lea.vmem %s3, %s1202
      // Predicated region
      $region33: #{tpu_custom_call.1} parent=31 // pred_check
        %p1204 = pneg %p100
      $region34: #{tpu_custom_call.1} parent=31 // pred_check_branch
        %1206 = sbr.rel (%p1204) target = $region36
      $region35: #{tpu_custom_call.1} parent=31 // pred_region
        %s1207 = smul.u32 64, %s14
      $region36: #{tpu_custom_call.1} parent=31 // pred_fallthru
        _
    $region32: #{tpu_custom_call.1} parent=5 // pred_fallthru
      _
    %p1208 = scmp.le.s32.totalorder 2, %s9
    // Predicated region
    $region37: #{tpu_custom_call.1} parent=5 // pred_check
      %p1209 = pneg %p1208
    $region38: #{tpu_custom_call.1} parent=5 // pred_check_branch
      %1211 = sbr.rel (%p1209) target = $region40
    $region39: #{tpu_custom_call.1} parent=5 // pred_region
      %s1212 = ssub.s32 %s9, 2
      // Predicated region
      $region41: #{tpu_custom_call.1} parent=39 // pred_check
        %p1213 = pneg %p106
      $region42: #{tpu_custom_call.1} parent=39 // pred_check_branch
        %1215 = sbr.rel (%p1213) target = $region44
      $region43: #{tpu_custom_call.1} parent=39 // pred_region
        %s1216 = smul.u32 64, %s15
        %p1217 = scmp.lt.s32.totalorder %s1216, 255
        %s1218 = scalar_select %p1217, %s1216, 255
        %s1219 = smul.addr %s1218, 4
        %s1220 = scalar_lea.vmem %s3, %s1219
      $region44: #{tpu_custom_call.1} parent=39 // pred_fallthru
        _
    $region40: #{tpu_custom_call.1} parent=5 // pred_fallthru
      _
  $region6: #{tpu_custom_call.1} parent=0 // loop_footer
    %s13 = sadd.s32 1, %s9
  $region7: #{tpu_custom_call.1} parent=0 // loop_footer_branch
    %8 = sbr.rel target = $region3
  $region8: #{tpu_custom_call.1} parent=0 // loop_exit
    _

</llo_original>
